<compile_context>
chip_gen: v7x
topology: tpu7x:2x2x1
jax: 0.10.0
libtpu: 0.0.40
codegen_flags: <defaults>
</compile_context>

<pallas_src>
import functools

import jax
import jax.numpy as jnp
import numpy as np
from jax.experimental import pallas as pl
from jax.experimental.pallas import tpu as pltpu


def cru_kernel(x_ref, wsq_ref, wy1_ref, bgwc_ref, wy2_ref, mask_ref, o_ref,
               *, C, cs1, W, HW, TB):
    """One grid step: TB batch samples, each a lane-dense (C, HW) slab."""
    for b in range(TB):                      # static unroll; TB is small
        x = x_ref[b]                         # (C, HW)

        # Fused squeeze1/squeeze2: one block-diagonal channel matmul (K = C).
        sq = jnp.dot(wsq_ref[...], x, preferred_element_type=jnp.float32)
        up_s = sq[:cs1]                      # (cs1, HW)  8-aligned slice
        low_s = sq[cs1:]                     # (cs2, HW)

        # Y1 = GWC(up_s) + PWC1(up_s) + bias as ONE im2col matmul: build the
        # (9*cs1, HW) stack of rolled + validity-masked copies (roll -> XLU,
        # static 0/1 mask -> one VPU mul per tap), then a single K=9*cs1 dot.
        taps = []
        for t in range(9):
            dy, dx = t // 3 - 1, t % 3 - 1
            s = dy * W + dx
            sh = up_s if s == 0 else pltpu.roll(up_s, shift=(-s) % HW, axis=1)
            taps.append(sh * mask_ref[t])    # mask_ref[t]: (1, HW)
        stacked = jnp.concatenate(taps, axis=0)            # (9*cs1, HW)
        y1 = jnp.dot(wy1_ref[...], stacked,
                     preferred_element_type=jnp.float32) + bgwc_ref[...]

        # Y2 = [PWC2(low_s); low_s] — identity folded into the weight.
        y2 = jnp.dot(wy2_ref[...], low_s, preferred_element_type=jnp.float32)

        # softmax(channel global-avg-pool) gate, fused with the final split+add.
        inv_hw = 1.0 / HW
        p1 = jnp.sum(y1, axis=-1, keepdims=True) * inv_hw  # (C, 1)
        p2 = jnp.sum(y2, axis=-1, keepdims=True) * inv_hw  # (C, 1)
        p = jnp.concatenate([p1, p2], axis=0)               # (2C, 1)
        m = jnp.max(p, axis=0, keepdims=True)
        e = jnp.exp(p - m)
        gate = e / jnp.sum(e, axis=0, keepdims=True)         # (2C, 1)

        o_ref[b] = (y1 * gate[:C] + y2 * gate[C:]).astype(o_ref.dtype)


def _pick_batch_tile(N, C, HW, batch_tile=None):
    if batch_tile is not None:
        assert N % batch_tile == 0
        return batch_tile
    # Keep >=2 grid steps on the "parallel" batch axis (v7x has 2 TensorCores)
    # while amortizing per-step overhead; stay far under the v7x 32 MiB scoped
    # VMEM budget (rough per-sample working set ~ 12 * C * HW * 4 bytes).
    per_sample = 12 * C * HW * 4
    budget = 8 << 20
    tb = 1
    for cand in range(1, N + 1):
        if N % cand == 0 and (N // cand) >= 2 and cand * per_sample <= budget:
            tb = cand
    return tb


def cru_pallas(x, params, *, alpha=0.5, squeeze_radio=2, group_size=2,
               group_kernel_size=3, batch_tile=None):
    N, C, H, W = x.shape
    up_c = int(alpha * C)
    low_c = C - up_c
    cs1 = up_c // squeeze_radio
    cs2 = low_c // squeeze_radio
    HW = H * W
    K = group_kernel_size
    assert K == 3, "kernel specialized for 3x3 GWC"
    assert cs1 % group_size == 0 and C % group_size == 0
    # Layout requirements of this specialization (pad host-side otherwise):
    assert HW % 128 == 0, "pad H*W to a multiple of 128 for lane-dense stores"
    assert C % 8 == 0 and cs1 % 8 == 0 and cs2 % 8 == 0, "8-aligned channel splits"

    f32 = jnp.float32

    # ---------- host-side constant folding (tiny arrays, done once) ----------
    # squeeze1 (+) squeeze2 -> block-diagonal (cs1+cs2, C)
    w_sq = jnp.zeros((cs1 + cs2, C), f32)
    w_sq = w_sq.at[:cs1, :up_c].set(params["w_sq1"][:, :, 0, 0])
    w_sq = w_sq.at[cs1:, up_c:].set(params["w_sq2"][:, :, 0, 0])

    # Grouped GWC dense-expanded (zeros off-group), PWC1 folded into the center
    # tap, flattened tap-major to (C, 9*cs1) to match the in-kernel im2col stack.
    og, ig = C // group_size, cs1 // group_size
    w_dense = jnp.zeros((C, cs1, K, K), f32)
    for g in range(group_size):
        w_dense = w_dense.at[g * og:(g + 1) * og, g * ig:(g + 1) * ig].set(
            params["w_gwc"][g * og:(g + 1) * og])
    w_dense = w_dense.at[:, :, K // 2, K // 2].add(params["w_pwc1"][:, :, 0, 0])
    w_y1 = jnp.transpose(w_dense, (0, 2, 3, 1)).reshape(C, K * K * cs1)
    b_gwc = params["b_gwc"].reshape(C, 1).astype(f32)

    # Y2 concat folded into the weight: [w_pwc2; I]  -> (C, cs2)
    w_y2 = jnp.concatenate(
        [params["w_pwc2"][:, :, 0, 0], jnp.eye(cs2, dtype=f32)], axis=0)

    # Static per-tap validity mask ("same" padding) for the flat shifts.
    ys, xs = np.meshgrid(np.arange(H), np.arange(W), indexing="ij")
    mask_np = np.zeros((K * K, 1, HW), np.float32)
    for t in range(K * K):
        dy, dx = t // K - 1, t % K - 1
        valid = ((ys + dy >= 0) & (ys + dy < H) &
                 (xs + dx >= 0) & (xs + dx < W))
        mask_np[t, 0] = valid.reshape(HW).astype(np.float32)
    mask = jnp.asarray(mask_np)

    x3 = x.reshape(N, C, HW)                 # lane-dense spatial axis
    TB = _pick_batch_tile(N, C, HW, batch_tile)

    kernel = functools.partial(cru_kernel, C=C, cs1=cs1, W=W, HW=HW, TB=TB)

    out = pl.pallas_call(
        kernel,
        out_shape=jax.ShapeDtypeStruct((N, C, HW), x.dtype),
        grid_spec=pltpu.PrefetchScalarGridSpec(
            num_scalar_prefetch=0,
            grid=(N // TB,),
            in_specs=[
                pl.BlockSpec((TB, C, HW), lambda n: (n, 0, 0)),     # x stream
                # constant weights / masks: constant index_map -> DMA'd once.
                # (pipeline_mode=pl.Buffered(1) would shave their double buffer
                #  on v7x; skipped here since they are tiny at these shapes.)
                pl.BlockSpec((cs1 + cs2, C), lambda n: (0, 0)),
                pl.BlockSpec((C, K * K * cs1), lambda n: (0, 0)),
                pl.BlockSpec((C, 1), lambda n: (0, 0)),
                pl.BlockSpec((C, cs2), lambda n: (0, 0)),
                pl.BlockSpec((K * K, 1, HW), lambda n: (0, 0, 0)),
            ],
            out_specs=pl.BlockSpec((TB, C, HW), lambda n: (n, 0, 0)),
        ),
        compiler_params=pltpu.CompilerParams(
            dimension_semantics=("parallel",)),   # batch axis -> both TCs on v7x
    )(x3, w_sq, w_y1, b_gwc, w_y2, mask)

    return out.reshape(N, C, H, W)


def cru_ref(x, params, *, alpha=0.5, squeeze_radio=2, group_size=2):
    """Pure-JAX reference mirroring the PyTorch CRU.forward (for validation)."""
    N, C, H, W = x.shape
    up_c = int(alpha * C)
    hp = jax.lax.Precision.HIGHEST

    def conv1x1(z, w):  # w: (Cout, Cin, 1, 1), no bias
        return jnp.einsum("nchw,oc->nohw", z, w[:, :, 0, 0], precision=hp)

    up, low = x[:, :up_c], x[:, up_c:]
    up_s = conv1x1(up, params["w_sq1"])
    low_s = conv1x1(low, params["w_sq2"])
    gwc = jax.lax.conv_general_dilated(
        up_s, params["w_gwc"], window_strides=(1, 1), padding=((1, 1), (1, 1)),
        dimension_numbers=("NCHW", "OIHW", "NCHW"),
        feature_group_count=group_size, precision=hp)
    gwc = gwc + params["b_gwc"][None, :, None, None]
    y1 = gwc + conv1x1(up_s, params["w_pwc1"])
    y2 = jnp.concatenate([conv1x1(low_s, params["w_pwc2"]), low_s], axis=1)
    out = jnp.concatenate([y1, y2], axis=1)
    pooled = out.mean(axis=(2, 3), keepdims=True)
    out = jax.nn.softmax(pooled, axis=1) * out
    half = out.shape[1] // 2
    return out[:, :half] + out[:, half:]


def init_cru_params(key, op_channel, *, alpha=0.5, squeeze_radio=2,
                    group_size=2, group_kernel_size=3):
    up_c = int(alpha * op_channel)
    low_c = op_channel - up_c
    cs1 = up_c // squeeze_radio
    cs2 = low_c // squeeze_radio
    k = jax.random.split(key, 6)
    sc = 0.1
    return {
        "w_sq1": sc * jax.random.normal(k[0], (cs1, up_c, 1, 1), jnp.float32),
        "w_sq2": sc * jax.random.normal(k[1], (cs2, low_c, 1, 1), jnp.float32),
        "w_gwc": sc * jax.random.normal(
            k[2], (op_channel, cs1 // group_size,
                   group_kernel_size, group_kernel_size), jnp.float32),
        "b_gwc": sc * jax.random.normal(k[3], (op_channel,), jnp.float32),
        "w_pwc1": sc * jax.random.normal(k[4], (op_channel, cs1, 1, 1), jnp.float32),
        "w_pwc2": sc * jax.random.normal(
            k[5], (op_channel - cs2, cs2, 1, 1), jnp.float32),
    }


if __name__ == "__main__":
    N, C, H, W = 2, 32, 16, 16   # H*W = 256 -> lane-dense; channel splits 8-aligned

    key = jax.random.PRNGKey(0)
    kx, kp = jax.random.split(key)
    x = jax.random.normal(kx, (N, C, H, W), dtype=jnp.float32)
    params = init_cru_params(kp, C)

    out = jax.block_until_ready(cru_pallas(x, params))
    ref = jax.block_until_ready(cru_ref(x, params))

    # Kernel matmuls use default (single-pass) MXU precision; reference stays at
    # HIGHEST, so compare with a bf16-pass-appropriate tolerance.
    np.testing.assert_allclose(np.asarray(out), np.asarray(ref),
                               rtol=2e-2, atol=2e-3)
    print("KERNEL_OK")
</pallas_src>

<mosaic_0001>
module attributes {stable_mosaic.version = 11 : i64} {
  func.func @cru_kernel(%arg0: i32, %arg1: memref<1x32x256xf32, #tpu.memory_space<vmem>>, %arg2: memref<16x32xf32, #tpu.memory_space<vmem>>, %arg3: memref<32x72xf32, #tpu.memory_space<vmem>>, %arg4: memref<32x1xf32, #tpu.memory_space<vmem>>, %arg5: memref<32x8xf32, #tpu.memory_space<vmem>>, %arg6: memref<9x1x256xf32, #tpu.memory_space<vmem>>, %arg7: memref<1x32x256xf32, #tpu.memory_space<vmem>>) attributes {dimension_semantics = [#tpu.dimension_semantics<parallel>], iteration_bounds = array<i64: 2>, scalar_prefetch = 0 : i64, scratch_operands = 0 : i64, tpu.core_type = #tpu.core_type<tc>, window_params = [{transform_indices = @transform_0, window_bounds = array<i64: 1, 32, 256>}, {pipeline_mode = #tpu.pipeline_mode<synchronous>, transform_indices = @transform_1, window_bounds = array<i64: 16, 32>}, {pipeline_mode = #tpu.pipeline_mode<synchronous>, transform_indices = @transform_2, window_bounds = array<i64: 32, 72>}, {pipeline_mode = #tpu.pipeline_mode<synchronous>, transform_indices = @transform_3, window_bounds = array<i64: 32, 1>}, {pipeline_mode = #tpu.pipeline_mode<synchronous>, transform_indices = @transform_4, window_bounds = array<i64: 32, 8>}, {pipeline_mode = #tpu.pipeline_mode<synchronous>, transform_indices = @transform_5, window_bounds = array<i64: 9, 1, 256>}, {transform_indices = @transform_6, window_bounds = array<i64: 1, 32, 256>}]} {
    %c0 = arith.constant 0 : index
    %c0_0 = arith.constant 0 : index
    %c0_1 = arith.constant 0 : index
    %0 = vector.load %arg1[%c0, %c0_0, %c0_1] : memref<1x32x256xf32, #tpu.memory_space<vmem>>, vector<1x32x256xf32>
    %1 = vector.shape_cast %0 : vector<1x32x256xf32> to vector<32x256xf32>
    %c0_2 = arith.constant 0 : index
    %c0_3 = arith.constant 0 : index
    %2 = vector.load %arg2[%c0_2, %c0_3] : memref<16x32xf32, #tpu.memory_space<vmem>>, vector<16x32xf32>
    %cst = arith.constant dense<0.000000e+00> : vector<16x256xf32>
    %3 = tpu.matmul %2, %1, %cst {dimension_numbers = #tpu.dot_dimension_numbers<[1], [0], [0], [1], [0, 0, 1, 1], [], []>} : vector<16x32xf32>, vector<32x256xf32>, vector<16x256xf32> -> vector<16x256xf32>
    %4 = vector.extract_strided_slice %3 {offsets = [0, 0], sizes = [8, 256], strides = [1, 1]} : vector<16x256xf32> to vector<8x256xf32>
    %5 = vector.extract_strided_slice %3 {offsets = [8, 0], sizes = [8, 256], strides = [1, 1]} : vector<16x256xf32> to vector<8x256xf32>
    %c17_i32 = arith.constant 17 : i32
    %6 = tpu.dynamic_rotate %4 by %c17_i32 dim 1 : vector<8x256xf32>, i32 -> vector<8x256xf32>
    %c0_4 = arith.constant 0 : index
    %c0_5 = arith.constant 0 : index
    %c0_6 = arith.constant 0 : index
    %7 = vector.load %arg6[%c0_4, %c0_5, %c0_6] : memref<9x1x256xf32, #tpu.memory_space<vmem>>, vector<1x1x256xf32>
    %8 = vector.shape_cast %7 : vector<1x1x256xf32> to vector<1x256xf32>
    %9 = vector.broadcast %8 : vector<1x256xf32> to vector<8x256xf32>
    %10 = arith.mulf %6, %9 : vector<8x256xf32>
    %c16_i32 = arith.constant 16 : i32
    %11 = tpu.dynamic_rotate %4 by %c16_i32 dim 1 : vector<8x256xf32>, i32 -> vector<8x256xf32>
    %c1 = arith.constant 1 : index
    %c0_7 = arith.constant 0 : index
    %c0_8 = arith.constant 0 : index
    %12 = vector.load %arg6[%c1, %c0_7, %c0_8] : memref<9x1x256xf32, #tpu.memory_space<vmem>>, vector<1x1x256xf32>
    %13 = vector.shape_cast %12 : vector<1x1x256xf32> to vector<1x256xf32>
    %14 = vector.broadcast %13 : vector<1x256xf32> to vector<8x256xf32>
    %15 = arith.mulf %11, %14 : vector<8x256xf32>
    %c15_i32 = arith.constant 15 : i32
    %16 = tpu.dynamic_rotate %4 by %c15_i32 dim 1 : vector<8x256xf32>, i32 -> vector<8x256xf32>
    %c2 = arith.constant 2 : index
    %c0_9 = arith.constant 0 : index
    %c0_10 = arith.constant 0 : index
    %17 = vector.load %arg6[%c2, %c0_9, %c0_10] : memref<9x1x256xf32, #tpu.memory_space<vmem>>, vector<1x1x256xf32>
    %18 = vector.shape_cast %17 : vector<1x1x256xf32> to vector<1x256xf32>
    %19 = vector.broadcast %18 : vector<1x256xf32> to vector<8x256xf32>
    %20 = arith.mulf %16, %19 : vector<8x256xf32>
    %c1_i32 = arith.constant 1 : i32
    %21 = tpu.dynamic_rotate %4 by %c1_i32 dim 1 : vector<8x256xf32>, i32 -> vector<8x256xf32>
    %c3 = arith.constant 3 : index
    %c0_11 = arith.constant 0 : index
    %c0_12 = arith.constant 0 : index
    %22 = vector.load %arg6[%c3, %c0_11, %c0_12] : memref<9x1x256xf32, #tpu.memory_space<vmem>>, vector<1x1x256xf32>
    %23 = vector.shape_cast %22 : vector<1x1x256xf32> to vector<1x256xf32>
    %24 = vector.broadcast %23 : vector<1x256xf32> to vector<8x256xf32>
    %25 = arith.mulf %21, %24 : vector<8x256xf32>
    %c4 = arith.constant 4 : index
    %c0_13 = arith.constant 0 : index
    %c0_14 = arith.constant 0 : index
    %26 = vector.load %arg6[%c4, %c0_13, %c0_14] : memref<9x1x256xf32, #tpu.memory_space<vmem>>, vector<1x1x256xf32>
    %27 = vector.shape_cast %26 : vector<1x1x256xf32> to vector<1x256xf32>
    %28 = vector.broadcast %27 : vector<1x256xf32> to vector<8x256xf32>
    %29 = arith.mulf %4, %28 : vector<8x256xf32>
    %c255_i32 = arith.constant 255 : i32
    %30 = tpu.dynamic_rotate %4 by %c255_i32 dim 1 : vector<8x256xf32>, i32 -> vector<8x256xf32>
    %c5 = arith.constant 5 : index
    %c0_15 = arith.constant 0 : index
    %c0_16 = arith.constant 0 : index
    %31 = vector.load %arg6[%c5, %c0_15, %c0_16] : memref<9x1x256xf32, #tpu.memory_space<vmem>>, vector<1x1x256xf32>
    %32 = vector.shape_cast %31 : vector<1x1x256xf32> to vector<1x256xf32>
    %33 = vector.broadcast %32 : vector<1x256xf32> to vector<8x256xf32>
    %34 = arith.mulf %30, %33 : vector<8x256xf32>
    %c241_i32 = arith.constant 241 : i32
    %35 = tpu.dynamic_rotate %4 by %c241_i32 dim 1 : vector<8x256xf32>, i32 -> vector<8x256xf32>
    %c6 = arith.constant 6 : index
    %c0_17 = arith.constant 0 : index
    %c0_18 = arith.constant 0 : index
    %36 = vector.load %arg6[%c6, %c0_17, %c0_18] : memref<9x1x256xf32, #tpu.memory_space<vmem>>, vector<1x1x256xf32>
    %37 = vector.shape_cast %36 : vector<1x1x256xf32> to vector<1x256xf32>
    %38 = vector.broadcast %37 : vector<1x256xf32> to vector<8x256xf32>
    %39 = arith.mulf %35, %38 : vector<8x256xf32>
    %c240_i32 = arith.constant 240 : i32
    %40 = tpu.dynamic_rotate %4 by %c240_i32 dim 1 : vector<8x256xf32>, i32 -> vector<8x256xf32>
    %c7 = arith.constant 7 : index
    %c0_19 = arith.constant 0 : index
    %c0_20 = arith.constant 0 : index
    %41 = vector.load %arg6[%c7, %c0_19, %c0_20] : memref<9x1x256xf32, #tpu.memory_space<vmem>>, vector<1x1x256xf32>
    %42 = vector.shape_cast %41 : vector<1x1x256xf32> to vector<1x256xf32>
    %43 = vector.broadcast %42 : vector<1x256xf32> to vector<8x256xf32>
    %44 = arith.mulf %40, %43 : vector<8x256xf32>
    %c239_i32 = arith.constant 239 : i32
    %45 = tpu.dynamic_rotate %4 by %c239_i32 dim 1 : vector<8x256xf32>, i32 -> vector<8x256xf32>
    %c8 = arith.constant 8 : index
    %c0_21 = arith.constant 0 : index
    %c0_22 = arith.constant 0 : index
    %46 = vector.load %arg6[%c8, %c0_21, %c0_22] : memref<9x1x256xf32, #tpu.memory_space<vmem>>, vector<1x1x256xf32>
    %47 = vector.shape_cast %46 : vector<1x1x256xf32> to vector<1x256xf32>
    %48 = vector.broadcast %47 : vector<1x256xf32> to vector<8x256xf32>
    %49 = arith.mulf %45, %48 : vector<8x256xf32>
    %50 = tpu.concatenate %10, %15, %20, %25, %29, %34, %39, %44, %49 in 0 : vector<8x256xf32>, vector<8x256xf32>, vector<8x256xf32>, vector<8x256xf32>, vector<8x256xf32>, vector<8x256xf32>, vector<8x256xf32>, vector<8x256xf32>, vector<8x256xf32> -> vector<72x256xf32>
    %c0_23 = arith.constant 0 : index
    %c0_24 = arith.constant 0 : index
    %51 = vector.load %arg3[%c0_23, %c0_24] : memref<32x72xf32, #tpu.memory_space<vmem>>, vector<32x72xf32>
    %cst_25 = arith.constant dense<0.000000e+00> : vector<32x256xf32>
    %52 = tpu.matmul %51, %50, %cst_25 {dimension_numbers = #tpu.dot_dimension_numbers<[1], [0], [0], [1], [0, 0, 1, 1], [], []>} : vector<32x72xf32>, vector<72x256xf32>, vector<32x256xf32> -> vector<32x256xf32>
    %c0_26 = arith.constant 0 : index
    %c0_27 = arith.constant 0 : index
    %53 = vector.load %arg4[%c0_26, %c0_27] : memref<32x1xf32, #tpu.memory_space<vmem>>, vector<32x1xf32>
    %54 = vector.broadcast %53 : vector<32x1xf32> to vector<32x256xf32>
    %55 = arith.addf %52, %54 : vector<32x256xf32>
    %c0_28 = arith.constant 0 : index
    %c0_29 = arith.constant 0 : index
    %56 = vector.load %arg5[%c0_28, %c0_29] : memref<32x8xf32, #tpu.memory_space<vmem>>, vector<32x8xf32>
    %cst_30 = arith.constant dense<0.000000e+00> : vector<32x256xf32>
    %57 = tpu.matmul %56, %5, %cst_30 {dimension_numbers = #tpu.dot_dimension_numbers<[1], [0], [0], [1], [0, 0, 1, 1], [], []>} : vector<32x8xf32>, vector<8x256xf32>, vector<32x256xf32> -> vector<32x256xf32>
    %cst_31 = arith.constant dense<0.000000e+00> : vector<32xf32>
    %58 = vector.multi_reduction <add>, %55, %cst_31 [1] : vector<32x256xf32> to vector<32xf32>
    %59 = vector.shape_cast %58 : vector<32xf32> to vector<32x1xf32>
    %cst_32 = arith.constant 3.906250e-03 : f32
    %60 = vector.broadcast %cst_32 : f32 to vector<32x1xf32>
    %61 = arith.mulf %59, %60 : vector<32x1xf32>
    %cst_33 = arith.constant dense<0.000000e+00> : vector<32xf32>
    %62 = vector.multi_reduction <add>, %57, %cst_33 [1] : vector<32x256xf32> to vector<32xf32>
    %63 = vector.shape_cast %62 : vector<32xf32> to vector<32x1xf32>
    %cst_34 = arith.constant 3.906250e-03 : f32
    %64 = vector.broadcast %cst_34 : f32 to vector<32x1xf32>
    %65 = arith.mulf %63, %64 : vector<32x1xf32>
    %66 = tpu.concatenate %61, %65 in 0 : vector<32x1xf32>, vector<32x1xf32> -> vector<64x1xf32>
    %cst_35 = arith.constant dense<0xFF800000> : vector<1xf32>
    %67 = vector.multi_reduction <maximumf>, %66, %cst_35 [0] : vector<64x1xf32> to vector<1xf32>
    %68 = vector.shape_cast %67 : vector<1xf32> to vector<1x1xf32>
    %69 = vector.broadcast %68 : vector<1x1xf32> to vector<64x1xf32>
    %70 = arith.subf %66, %69 : vector<64x1xf32>
    %71 = math.exp %70 : vector<64x1xf32>
    %cst_36 = arith.constant dense<0.000000e+00> : vector<1xf32>
    %72 = vector.multi_reduction <add>, %71, %cst_36 [0] : vector<64x1xf32> to vector<1xf32>
    %73 = vector.shape_cast %72 : vector<1xf32> to vector<1x1xf32>
    %74 = vector.broadcast %73 : vector<1x1xf32> to vector<64x1xf32>
    %75 = arith.divf %71, %74 : vector<64x1xf32>
    %76 = vector.extract_strided_slice %75 {offsets = [0, 0], sizes = [32, 1], strides = [1, 1]} : vector<64x1xf32> to vector<32x1xf32>
    %77 = vector.broadcast %76 : vector<32x1xf32> to vector<32x256xf32>
    %78 = arith.mulf %55, %77 : vector<32x256xf32>
    %79 = vector.extract_strided_slice %75 {offsets = [32, 0], sizes = [32, 1], strides = [1, 1]} : vector<64x1xf32> to vector<32x1xf32>
    %80 = vector.broadcast %79 : vector<32x1xf32> to vector<32x256xf32>
    %81 = arith.mulf %57, %80 : vector<32x256xf32>
    %82 = arith.addf %78, %81 : vector<32x256xf32>
    %c0_37 = arith.constant 0 : index
    %c0_38 = arith.constant 0 : index
    %c0_39 = arith.constant 0 : index
    %83 = vector.load %arg7[%c0_37, %c0_38, %c0_39] : memref<1x32x256xf32, #tpu.memory_space<vmem>>, vector<1x32x256xf32>
    %84 = vector.shape_cast %83 : vector<1x32x256xf32> to vector<32x256xf32>
    %85 = vector.shape_cast %82 : vector<32x256xf32> to vector<1x32x256xf32>
    tpu.vector_store %arg7[%c0_37, %c0_38, %c0_39], %85 {strides = array<i32>} : memref<1x32x256xf32, #tpu.memory_space<vmem>>, vector<1x32x256xf32>,
    return
  }
  func.func @transform_0(%arg0: i32) -> (i32, i32, i32) {
    %c0_i32 = arith.constant 0 : i32
    %c0_i32_0 = arith.constant 0 : i32
    %c0_i32_1 = arith.constant 0 : i32
    return %arg0, %c0_i32, %c0_i32_0 : i32, i32, i32
  }
  func.func @transform_1(%arg0: i32) -> (i32, i32) {
    %c0_i32 = arith.constant 0 : i32
    %c0_i32_0 = arith.constant 0 : i32
    %c0_i32_1 = arith.constant 0 : i32
    return %c0_i32, %c0_i32_0 : i32, i32
  }
  func.func @transform_2(%arg0: i32) -> (i32, i32) {
    %c0_i32 = arith.constant 0 : i32
    %c0_i32_0 = arith.constant 0 : i32
    %c0_i32_1 = arith.constant 0 : i32
    return %c0_i32, %c0_i32_0 : i32, i32
  }
  func.func @transform_3(%arg0: i32) -> (i32, i32) {
    %c0_i32 = arith.constant 0 : i32
    %c0_i32_0 = arith.constant 0 : i32
    %c0_i32_1 = arith.constant 0 : i32
    return %c0_i32, %c0_i32_0 : i32, i32
  }
  func.func @transform_4(%arg0: i32) -> (i32, i32) {
    %c0_i32 = arith.constant 0 : i32
    %c0_i32_0 = arith.constant 0 : i32
    %c0_i32_1 = arith.constant 0 : i32
    return %c0_i32, %c0_i32_0 : i32, i32
  }
  func.func @transform_5(%arg0: i32) -> (i32, i32, i32) {
    %c0_i32 = arith.constant 0 : i32
    %c0_i32_0 = arith.constant 0 : i32
    %c0_i32_1 = arith.constant 0 : i32
    %c0_i32_2 = arith.constant 0 : i32
    return %c0_i32, %c0_i32_0, %c0_i32_1 : i32, i32, i32
  }
  func.func @transform_6(%arg0: i32) -> (i32, i32, i32) {
    %c0_i32 = arith.constant 0 : i32
    %c0_i32_0 = arith.constant 0 : i32
    %c0_i32_1 = arith.constant 0 : i32
    return %arg0, %c0_i32, %c0_i32_0 : i32, i32, i32
  }
}

</mosaic_0001>

<llo_original>
// kernel: tpu_custom_call.1
$region0: #{tpu_custom_call.1}
  #allocation0 [shape = 'u32[]', space=smem, size = 0x4, offset = 0x4, fixed_abs, tag = 'smem constant byte address 0x4 - core index']
  #allocation1 [shape = 'u32[144,128]{1,0:T(1,128)}', space=vmem, size = 0x12000, scoped, tag = 'internal scratch']
  %s0 = inlined_call_operand.hbm [shape: f32[2,32,256], index: 0, kind: input, shape index: {}]
  %s1 = inlined_call_operand.vmem [shape: f32[16,32], index: 1, kind: input, shape index: {}]
  %s2 = inlined_call_operand.vmem [shape: f32[32,72], index: 2, kind: input, shape index: {}]
  %s3 = inlined_call_operand.vmem [shape: f32[32,1], index: 3, kind: input, shape index: {}]
  %s4 = inlined_call_operand.vmem [shape: f32[32,8], index: 4, kind: input, shape index: {}]
  %s5 = inlined_call_operand.vmem [shape: f32[9,1,256], index: 5, kind: input, shape index: {}]
  %s6 = inlined_call_operand.hbm [shape: f32[2,32,256], index: 6, kind: output, shape index: {}]
  %s7 = sld [smem:[#allocation0]]
  $region61: #{tpu_custom_call.1} parent=0
    _
  %s9 = ssub.s32 1, %s7
  %s10 = scalar_select 0, %s9, %s7
  $region1: #{tpu_custom_call.1} parent=0
    #allocation2 [shape = 'u8[65536]{0}', space=vmem, size = 0x10000, scoped, tag = 'input window, operand 0']
    #allocation3 [shape = 's32[2]{0}', space=sflag, size = 0x8, scoped, tag = 'scoped memory for tpu_custom_call.1']
    #allocation4 [shape = 's32[2]{0}', space=sflag, size = 0x8, scoped, tag = 'scoped memory for tpu_custom_call.1']
    #allocation5 [shape = 'u8[65536]{0}', space=vmem, size = 0x10000, scoped, tag = 'output window, operand 0']
    %11 = vsyncpa [#allocation3], 0
    %s12 = scalar_lea.sflag [#allocation3], 1
    %13 = vsyncpa %s12, 0
    %14 = vsyncpa [#allocation4], 0
    %s15 = scalar_lea.sflag [#allocation4], 1
    %16 = vsyncpa %s15, 0
    loop: start=0, step=1, limit=4
    $region2: #{tpu_custom_call.1} parent=1 // loop_pre_header
      _
    $region3: #{tpu_custom_call.1} parent=1 // loop_header
      %s18 = sphi 0, %s22
      %p19 = scmp.ge.s32.totalorder %s18, 4
      %s28 = sphi 0, %s30
      %s31 = sphi 0, %s28
      %s32 = sphi 0, %s31
      %s48 = sphi 0, %s32
      %s52 = sphi 0, %s52
      %s54 = sphi 0, %s52
      %s55 = sphi 0, %s54
      %s69 = sphi 0, %s55
      %s73 = sphi 0, %s73
      %s75 = sphi 0, %s73
      %s76 = sphi 0, %s75
      %s90 = sphi 0, %s76
      %s94 = sphi 0, %s94
      %s96 = sphi 0, %s94
      %s97 = sphi 0, %s96
      %s111 = sphi 0, %s97
      %s115 = sphi 0, %s115
      %s117 = sphi 0, %s115
      %s118 = sphi 0, %s117
      %s132 = sphi 0, %s118
      %s136 = sphi 0, %s136
      %s138 = sphi 0, %s136
      %s139 = sphi 0, %s138
      %s153 = sphi 0, %s139
      %s159 = sphi 0, %s161
      %s162 = sphi 0, %s159
      %s163 = sphi 0, %s162
      %s179 = sphi 0, %s163
    $region4: #{tpu_custom_call.1} parent=1 // loop_header_branch
      %21 = sbr.rel (%p19) target = $region8
    $region5: #{tpu_custom_call.1} parent=1 // loop_body
      %s23 = ssub.s32 %s18, 1
      %s24 = ssub.s32 %s18, 2
      %s25 = sadd.s32 %s18, 1
      %s26 = ssub.s32 %s18, %s25
      %p27 = scmp.eq.s32.totalorder %s26, 0
      %s29 = sadd.s32 %s28, 1
      %s30 = scalar_select %p27, %s28, %s29
      %p33 = pneg %p27
      %p34 = scmp.eq.s32.totalorder %s18, 1
      %p35 = por %p33, %p34
      %p36 = scmp.ne.s32.totalorder %s28, %s31
      %p37 = scmp.eq.s32.totalorder %s18, 0
      %p38 = por %p36, %p37
      %p39 = scmp.ne.s32.totalorder %s28, %s31
      %p40 = scmp.eq.s32.totalorder %s23, 1
      %p41 = por %p39, %p40
      %p42 = scmp.ne.s32.totalorder %s31, %s32
      %p43 = scmp.eq.s32.totalorder %s23, 0
      %p44 = por %p42, %p43
      %p45 = scmp.ne.s32.totalorder %s31, %s32
      %p46 = scmp.eq.s32.totalorder %s24, 1
      %p47 = por %p45, %p46
      %p49 = scmp.ne.s32.totalorder %s32, %s48
      %p50 = scmp.eq.s32.totalorder %s24, 0
      %p51 = por %p49, %p50
      %s53 = sadd.s32 %s52, 1
      %p56 = scmp.eq.s32.totalorder %s18, 1
      %p57 = scmp.ne.s32.totalorder %s52, %s54
      %p58 = scmp.eq.s32.totalorder %s18, 0
      %p59 = por %p57, %p58
      %p60 = scmp.ne.s32.totalorder %s52, %s54
      %p61 = scmp.eq.s32.totalorder %s23, 1
      %p62 = por %p60, %p61
      %p63 = scmp.ne.s32.totalorder %s54, %s55
      %p64 = scmp.eq.s32.totalorder %s23, 0
      %p65 = por %p63, %p64
      %p66 = scmp.ne.s32.totalorder %s54, %s55
      %p67 = scmp.eq.s32.totalorder %s24, 1
      %p68 = por %p66, %p67
      %p70 = scmp.ne.s32.totalorder %s55, %s69
      %p71 = scmp.eq.s32.totalorder %s24, 0
      %p72 = por %p70, %p71
      %s74 = sadd.s32 %s73, 1
      %p77 = scmp.eq.s32.totalorder %s18, 1
      %p78 = scmp.ne.s32.totalorder %s73, %s75
      %p79 = scmp.eq.s32.totalorder %s18, 0
      %p80 = por %p78, %p79
      %p81 = scmp.ne.s32.totalorder %s73, %s75
      %p82 = scmp.eq.s32.totalorder %s23, 1
      %p83 = por %p81, %p82
      %p84 = scmp.ne.s32.totalorder %s75, %s76
      %p85 = scmp.eq.s32.totalorder %s23, 0
      %p86 = por %p84, %p85
      %p87 = scmp.ne.s32.totalorder %s75, %s76
      %p88 = scmp.eq.s32.totalorder %s24, 1
      %p89 = por %p87, %p88
      %p91 = scmp.ne.s32.totalorder %s76, %s90
      %p92 = scmp.eq.s32.totalorder %s24, 0
      %p93 = por %p91, %p92
      %s95 = sadd.s32 %s94, 1
      %p98 = scmp.eq.s32.totalorder %s18, 1
      %p99 = scmp.ne.s32.totalorder %s94, %s96
      %p100 = scmp.eq.s32.totalorder %s18, 0
      %p101 = por %p99, %p100
      %p102 = scmp.ne.s32.totalorder %s94, %s96
      %p103 = scmp.eq.s32.totalorder %s23, 1
      %p104 = por %p102, %p103
      %p105 = scmp.ne.s32.totalorder %s96, %s97
      %p106 = scmp.eq.s32.totalorder %s23, 0
      %p107 = por %p105, %p106
      %p108 = scmp.ne.s32.totalorder %s96, %s97
      %p109 = scmp.eq.s32.totalorder %s24, 1
      %p110 = por %p108, %p109
      %p112 = scmp.ne.s32.totalorder %s97, %s111
      %p113 = scmp.eq.s32.totalorder %s24, 0
      %p114 = por %p112, %p113
      %s116 = sadd.s32 %s115, 1
      %p119 = scmp.eq.s32.totalorder %s18, 1
      %p120 = scmp.ne.s32.totalorder %s115, %s117
      %p121 = scmp.eq.s32.totalorder %s18, 0
      %p122 = por %p120, %p121
      %p123 = scmp.ne.s32.totalorder %s115, %s117
      %p124 = scmp.eq.s32.totalorder %s23, 1
      %p125 = por %p123, %p124
      %p126 = scmp.ne.s32.totalorder %s117, %s118
      %p127 = scmp.eq.s32.totalorder %s23, 0
      %p128 = por %p126, %p127
      %p129 = scmp.ne.s32.totalorder %s117, %s118
      %p130 = scmp.eq.s32.totalorder %s24, 1
      %p131 = por %p129, %p130
      %p133 = scmp.ne.s32.totalorder %s118, %s132
      %p134 = scmp.eq.s32.totalorder %s24, 0
      %p135 = por %p133, %p134
      %s137 = sadd.s32 %s136, 1
      %p140 = scmp.eq.s32.totalorder %s18, 1
      %p141 = scmp.ne.s32.totalorder %s136, %s138
      %p142 = scmp.eq.s32.totalorder %s18, 0
      %p143 = por %p141, %p142
      %p144 = scmp.ne.s32.totalorder %s136, %s138
      %p145 = scmp.eq.s32.totalorder %s23, 1
      %p146 = por %p144, %p145
      %p147 = scmp.ne.s32.totalorder %s138, %s139
      %p148 = scmp.eq.s32.totalorder %s23, 0
      %p149 = por %p147, %p148
      %p150 = scmp.ne.s32.totalorder %s138, %s139
      %p151 = scmp.eq.s32.totalorder %s24, 1
      %p152 = por %p150, %p151
      %p154 = scmp.ne.s32.totalorder %s139, %s153
      %p155 = scmp.eq.s32.totalorder %s24, 0
      %p156 = por %p154, %p155
      %s157 = ssub.s32 %s18, %s25
      %p158 = scmp.eq.s32.totalorder %s157, 0
      %s160 = sadd.s32 %s159, 1
      %s161 = scalar_select %p158, %s159, %s160
      %p164 = pneg %p158
      %p165 = scmp.eq.s32.totalorder %s18, 1
      %p166 = por %p164, %p165
      %p167 = scmp.ne.s32.totalorder %s159, %s162
      %p168 = scmp.eq.s32.totalorder %s18, 0
      %p169 = por %p167, %p168
      %p170 = scmp.ne.s32.totalorder %s159, %s162
      %p171 = scmp.eq.s32.totalorder %s23, 1
      %p172 = por %p170, %p171
      %p173 = scmp.ne.s32.totalorder %s162, %s163
      %p174 = scmp.eq.s32.totalorder %s23, 0
      %p175 = por %p173, %p174
      %p176 = scmp.ne.s32.totalorder %s162, %s163
      %p177 = scmp.eq.s32.totalorder %s24, 1
      %p178 = por %p176, %p177
      %p180 = scmp.ne.s32.totalorder %s163, %s179
      %p181 = scmp.eq.s32.totalorder %s24, 0
      %p182 = por %p180, %p181
      %p183 = scmp.le.s32.totalorder 1, %s18
      %p184 = scmp.lt.s32.totalorder %s18, 3
      %p185 = pnand %p183, %p184
      %p186 = pneg %p185
      // Predicated region
      $region9: #{tpu_custom_call.1} parent=5 // pred_check
        _
      $region10: #{tpu_custom_call.1} parent=5 // pred_check_branch
        %188 = sbr.rel (%p185) target = $region12
      $region11: #{tpu_custom_call.1} parent=5 // pred_region
        %s189 = ssub.s32 %s18, 1
        // Predicated region
        $region13: #{tpu_custom_call.1} parent=11 // pred_check
          %p190 = pneg %p65
        $region14: #{tpu_custom_call.1} parent=11 // pred_check_branch
          %192 = sbr.rel (%p190) target = $region16
        $region15: #{tpu_custom_call.1} parent=11 // pred_region
          _
        $region16: #{tpu_custom_call.1} parent=11 // pred_fallthru
          _
        // Predicated region
        $region17: #{tpu_custom_call.1} parent=11 // pred_check
          %p193 = pneg %p86
        $region18: #{tpu_custom_call.1} parent=11 // pred_check_branch
          %195 = sbr.rel (%p193) target = $region20
        $region19: #{tpu_custom_call.1} parent=11 // pred_region
          _
        $region20: #{tpu_custom_call.1} parent=11 // pred_fallthru
          _
        // Predicated region
        $region21: #{tpu_custom_call.1} parent=11 // pred_check
          %p196 = pneg %p107
        $region22: #{tpu_custom_call.1} parent=11 // pred_check_branch
          %198 = sbr.rel (%p196) target = $region24
        $region23: #{tpu_custom_call.1} parent=11 // pred_region
          _
        $region24: #{tpu_custom_call.1} parent=11 // pred_fallthru
          _
        // Predicated region
        $region25: #{tpu_custom_call.1} parent=11 // pred_check
          %p199 = pneg %p128
        $region26: #{tpu_custom_call.1} parent=11 // pred_check_branch
          %201 = sbr.rel (%p199) target = $region28
        $region27: #{tpu_custom_call.1} parent=11 // pred_region
          _
        $region28: #{tpu_custom_call.1} parent=11 // pred_fallthru
          _
        // Predicated region
        $region29: #{tpu_custom_call.1} parent=11 // pred_check
          %p202 = pneg %p149
        $region30: #{tpu_custom_call.1} parent=11 // pred_check_branch
          %204 = sbr.rel (%p202) target = $region32
        $region31: #{tpu_custom_call.1} parent=11 // pred_region
          _
        $region32: #{tpu_custom_call.1} parent=11 // pred_fallthru
          _
      $region12: #{tpu_custom_call.1} parent=5 // pred_fallthru
        _
      %p205 = scmp.lt.s32.totalorder %s18, 2
      // Predicated region
      $region33: #{tpu_custom_call.1} parent=5 // pred_check
        %p206 = pneg %p205
      $region34: #{tpu_custom_call.1} parent=5 // pred_check_branch
        %208 = sbr.rel (%p206) target = $region36
      $region35: #{tpu_custom_call.1} parent=5 // pred_region
        // Predicated region
        $region37: #{tpu_custom_call.1} parent=35 // pred_check
          %p209 = pneg %p38
        $region38: #{tpu_custom_call.1} parent=35 // pred_check_branch
          %211 = sbr.rel (%p209) target = $region40
        $region39: #{tpu_custom_call.1} parent=35 // pred_region
          %s212 = sand.u32 %s28, 1
          %s213 = scalar_lea.sflag [#allocation3], %s212
          %s214 = sand.u32 %s28, 1
          %s215 = smul.addr %s214, 64
          %s216 = scalar_lea.vmem [#allocation2], %s215
          %s218 = ssub.s32 1024, 1024
          %219 = vsyncadd %s213, %s218
          %s220 = smul.addr %s18, 8
          %s221 = smul.addr %s220, 128
          %s222 = scalar_lea.hbm %s0, %s221
          %s223 = sshll.u32 %s216, 4
          %s224 = int_to_ptr.vmem [resolvable:$true] %s223
          %229 = dma.hbm_to_vmem [thread:$0]  %s222, 1024, %s224, %s213, 256, 256, 16
        $region40: #{tpu_custom_call.1} parent=35 // pred_fallthru
          _
      $region36: #{tpu_custom_call.1} parent=5 // pred_fallthru
        _
      %p230 = scmp.le.s32.totalorder 1, %s18
      %p231 = scmp.lt.s32.totalorder %s18, 3
      %p232 = pnand %p230, %p231
      %p233 = pneg %p232
      // Predicated region
      $region41: #{tpu_custom_call.1} parent=5 // pred_check
        _
      $region42: #{tpu_custom_call.1} parent=5 // pred_check_branch
        %235 = sbr.rel (%p232) target = $region44
      $region43: #{tpu_custom_call.1} parent=5 // pred_region
        %s236 = ssub.s32 %s18, 1
        %s237 = sand.u32 %s31, 1
        %s238 = scalar_lea.sflag [#allocation3], %s237
        %s239 = sand.u32 %s31, 1
        %s240 = smul.addr %s239, 64
        %s241 = scalar_lea.vmem [#allocation2], %s240
        // Predicated region
        $region45: #{tpu_custom_call.1} parent=43 // pred_check
          %p242 = pneg %p44
        $region46: #{tpu_custom_call.1} parent=43 // pred_check_branch
          %244 = sbr.rel (%p242) target = $region48
        $region47: #{tpu_custom_call.1} parent=43 // pred_region
          %245 = dma.done %s238, 1024
        $region48: #{tpu_custom_call.1} parent=43 // pred_fallthru
          _
        %s246 = sand.u32 %s31, 1
        %s247 = scalar_lea.sflag [#allocation3], %s246
        %s248 = sand.u32 %s31, 1
        %s249 = smul.addr %s248, 64
        %s250 = scalar_lea.vmem [#allocation2], %s249
        %p251 = pneg %p44
        %p252 = pneg %p41
        %p253 = pneg %p65
        %p254 = pneg %p62
        %p255 = pneg %p86
        %p256 = pneg %p83
        %p257 = pneg %p107
        %p258 = pneg %p104
        %p259 = pneg %p128
        %p260 = pneg %p125
        %p261 = pneg %p149
        %p262 = pneg %p146
        %p263 = pneg %p175
        %p264 = pneg %p172
        %s265 = sand.u32 %s162, 1
        %s266 = scalar_lea.sflag [#allocation4], %s265
        %s267 = sand.u32 %s162, 1
        %s268 = smul.addr %s267, 64
        %s269 = scalar_lea.vmem [#allocation5], %s268
        %v270 = vld [vmem:[%s241] sm:$0xff]
        %v271 = vld [vmem:[%s241 + $0x8] sm:$0xff]
        %v272 = vld [vmem:[%s241 + $0x10] sm:$0xff]
        %v273 = vld [vmem:[%s241 + $0x18] sm:$0xff]
        %v274 = vld [vmem:[%s241 + $0x20] sm:$0xff]
        %v275 = vld [vmem:[%s241 + $0x28] sm:$0xff]
        %v276 = vld [vmem:[%s241 + $0x30] sm:$0xff]
        %v277 = vld [vmem:[%s241 + $0x38] sm:$0xff]
        %v278 = vld [vmem:[%s1] sm:$0xff]
        %v279 = vld [vmem:[%s1 + $0x8] sm:$0xff]
        %vm280 = vcmask 261120
        %v282 = vsel %vm280, %v278, 0
        %v285 = vsel %vm280, %v279, 0
        %287 = vmatprep.subr.mxu0 %v271
        %288 = vmatpush1.msra.mxu0 %v270
        %289 = vmatprep.subr.mxu0 %v273
        %290 = vmatpush1.msra.mxu0 %v272
        %291 = vmatprep.subr.mxu0 %v275
        %292 = vmatpush1.msra.mxu0 %v274
        %293 = vmatprep.subr.mxu0 %v277
        %294 = vmatpush1.msra.mxu0 %v276
        %295 = vmatprep.subr.mxu0 0.0
        %296 = vmatpush1.msra.mxu0 0.0
        %297 = vmatprep.subr.mxu0 0.0
        %298 = vmatpush1.msra.mxu0 0.0
        %299 = vmatprep.subr.mxu0 0.0
        %300 = vmatpush1.msra.mxu0 0.0
        %301 = vmatprep.subr.mxu0 0.0
        %302 = vmatpush1.msra.mxu0 0.0
        %303 = vmatprep.subr.mxu0 0.0
        %304 = vmatpush1.msra.mxu0 0.0
        %305 = vmatprep.subr.mxu0 0.0
        %306 = vmatpush1.msra.mxu0 0.0
        %307 = vmatprep.subr.mxu0 0.0
        %308 = vmatpush1.msra.mxu0 0.0
        %309 = vmatprep.subr.mxu0 0.0
        %310 = vmatpush1.msra.mxu0 0.0
        %311 = vmatprep.subr.mxu0 0.0
        %312 = vmatpush1.msra.mxu0 0.0
        %313 = vmatprep.subr.mxu0 0.0
        %314 = vmatpush1.msra.mxu0 0.0
        %315 = vmatprep.subr.mxu0 0.0
        %316 = vmatpush1.msra.mxu0 0.0
        %317 = vmatprep.subr.mxu0 0.0
        %318 = vmatpush1.msra.mxu0 0.0
        %319 = vmatprep.subr.mxu0 0.0
        %320 = vmatpush1.msra.mxu0 0.0
        %321 = vmatprep.subr.mxu0 0.0
        %322 = vmatpush1.msra.mxu0 0.0
        %323 = vmatprep.subr.mxu0 0.0
        %324 = vmatpush1.msra.mxu0 0.0
        %325 = vmatprep.subr.mxu0 0.0
        %326 = vmatpush1.msra.mxu0 0.0
        %327 = vmatprep.subr.mxu0 0.0
        %328 = vmatpush1.msra.mxu0 0.0
        %329 = vmatprep.subr.mxu0 0.0
        %330 = vmatpush1.msra.mxu0 0.0
        %331 = vmatprep.subr.mxu0 0.0
        %332 = vmatpush1.msra.mxu0 0.0
        %333 = vmatprep.subr.mxu0 0.0
        %334 = vmatpush1.msra.mxu0 0.0
        %335 = vmatprep.subr.mxu0 0.0
        %336 = vmatpush1.msra.mxu0 0.0
        %337 = vmatprep.subr.mxu0 0.0
        %338 = vmatpush1.msra.mxu0 0.0
        %339 = vmatprep.subr.mxu0 0.0
        %340 = vmatpush1.msra.mxu0 0.0
        %341 = vmatprep.subr.mxu0 0.0
        %342 = vmatpush1.msra.mxu0 0.0
        %343 = vmatprep.subr.mxu0 0.0
        %344 = vmatpush1.msra.mxu0 0.0
        %345 = vmatprep.subr.mxu0 0.0
        %346 = vmatpush1.msra.mxu0 0.0
        %347 = vmatprep.subr.mxu0 0.0
        %348 = vmatpush1.msra.mxu0 0.0
        %349 = vmatprep.subr.mxu0 0.0
        %350 = vmatpush1.msra.mxu0 0.0
        %351 = vmatprep.mubr.f32.mxu0 0.0
        %352 = vmatmul.mubr.f32.gmra.mrb[0].mxu0 %v282
        %v353 = vpop.f32.mrb[0].mxu0
        %v354 = vadd.f32 0.0, %v353
        %v355 = vpop.f32.mrb[0].mxu0
        %v356 = vadd.f32 0.0, %v355
        %357 = vmatprep.mubr.f32.mxu0 0.0
        %358 = vmatmul.mubr.f32.gmra.mrb[0].mxu0 %v285
        %v359 = vpop.f32.mrb[0].mxu0
        %v360 = vadd.f32 0.0, %v359
        %v361 = vpop.f32.mrb[0].mxu0
        %v362 = vadd.f32 0.0, %v361
        %363 = vdwg.mxu0
        %364 = vrot.lane.b32.xlu0 %v354, 17
        %v365 = vpop.permute.xlu0 %364
        %366 = vrot.lane.b32.xlu0 %v356, 17
        %v367 = vpop.permute.xlu0 %366
        %v368 = vlaneseq
        %v369 = vand.u32 %v368, 127
        %vm370 = vcmp.lt.s32.totalorder %v369, 17
        %v371 = vsel %vm370, %v365, %v367
        %v372 = vsel %vm370, %v367, %v365
        %v373 = vld [vmem:[%s5] sm:$0x3]
        %v375 = vlaneseq
        %v376 = vshrl.u32 %v375, 7
        %v377 = vsub.s32 0, %v376
        %v378 = vrot.slane %v373, %v377
        %v379 = vlaneseq
        %v380 = vshrl.u32 %v379, 7
        %v381 = vsub.s32 1, %v380
        %v382 = vrot.slane %v373, %v381
        %v385 = vmul.f32 %v372, %v378
        %v386 = vmul.f32 %v371, %v382
        %387 = vrot.lane.b32.xlu0 %v354, 16
        %v388 = vpop.permute.xlu0 %387
        %389 = vrot.lane.b32.xlu0 %v356, 16
        %v390 = vpop.permute.xlu0 %389
        %vm391 = vcmp.lt.s32.totalorder %v369, 16
        %v392 = vsel %vm391, %v388, %v390
        %v393 = vsel %vm391, %v390, %v388
        %s394 = scalar_lea.vmem %s5, 2
        %v395 = vld [vmem:[%s394] sm:$0x3]
        %v397 = vlaneseq
        %v398 = vshrl.u32 %v397, 7
        %v399 = vsub.s32 0, %v398
        %v400 = vrot.slane %v395, %v399
        %v401 = vlaneseq
        %v402 = vshrl.u32 %v401, 7
        %v403 = vsub.s32 1, %v402
        %v404 = vrot.slane %v395, %v403
        %v407 = vmul.f32 %v393, %v400
        %v408 = vmul.f32 %v392, %v404
        %409 = vrot.lane.b32.xlu0 %v354, 15
        %v410 = vpop.permute.xlu0 %409
        %411 = vrot.lane.b32.xlu0 %v356, 15
        %v412 = vpop.permute.xlu0 %411
        %vm413 = vcmp.lt.s32.totalorder %v369, 15
        %v414 = vsel %vm413, %v410, %v412
        %v415 = vsel %vm413, %v412, %v410
        %s416 = scalar_lea.vmem %s5, 4
        %v417 = vld [vmem:[%s416] sm:$0x3]
        %v419 = vlaneseq
        %v420 = vshrl.u32 %v419, 7
        %v421 = vsub.s32 0, %v420
        %v422 = vrot.slane %v417, %v421
        %v423 = vlaneseq
        %v424 = vshrl.u32 %v423, 7
        %v425 = vsub.s32 1, %v424
        %v426 = vrot.slane %v417, %v425
        %v429 = vmul.f32 %v415, %v422
        %v430 = vmul.f32 %v414, %v426
        %431 = vrot.lane.b32.xlu0 %v354, 1
        %v432 = vpop.permute.xlu0 %431
        %433 = vrot.lane.b32.xlu0 %v356, 1
        %v434 = vpop.permute.xlu0 %433
        %vm435 = vcmp.lt.s32.totalorder %v369, 1
        %v436 = vsel %vm435, %v432, %v434
        %v437 = vsel %vm435, %v434, %v432
        %s438 = scalar_lea.vmem %s5, 6
        %v439 = vld [vmem:[%s438] sm:$0x3]
        %v441 = vlaneseq
        %v442 = vshrl.u32 %v441, 7
        %v443 = vsub.s32 0, %v442
        %v444 = vrot.slane %v439, %v443
        %v445 = vlaneseq
        %v446 = vshrl.u32 %v445, 7
        %v447 = vsub.s32 1, %v446
        %v448 = vrot.slane %v439, %v447
        %v451 = vmul.f32 %v437, %v444
        %v452 = vmul.f32 %v436, %v448
        %s453 = scalar_lea.vmem %s5, 8
        %v454 = vld [vmem:[%s453] sm:$0x3]
        %v456 = vlaneseq
        %v457 = vshrl.u32 %v456, 7
        %v458 = vsub.s32 0, %v457
        %v459 = vrot.slane %v454, %v458
        %v460 = vlaneseq
        %v461 = vshrl.u32 %v460, 7
        %v462 = vsub.s32 1, %v461
        %v463 = vrot.slane %v454, %v462
        %v466 = vmul.f32 %v354, %v459
        %v467 = vmul.f32 %v356, %v463
        %468 = vrot.lane.b32.xlu0 %v354, 127
        %v469 = vpop.permute.xlu0 %468
        %470 = vrot.lane.b32.xlu0 %v356, 127
        %v471 = vpop.permute.xlu0 %470
        %vm472 = vcmp.lt.s32.totalorder %v369, 127
        %v473 = vsel %vm472, %v469, %v471
        %v474 = vsel %vm472, %v471, %v469
        %s475 = scalar_lea.vmem %s5, 10
        %v476 = vld [vmem:[%s475] sm:$0x3]
        %v478 = vlaneseq
        %v479 = vshrl.u32 %v478, 7
        %v480 = vsub.s32 0, %v479
        %v481 = vrot.slane %v476, %v480
        %v482 = vlaneseq
        %v483 = vshrl.u32 %v482, 7
        %v484 = vsub.s32 1, %v483
        %v485 = vrot.slane %v476, %v484
        %v488 = vmul.f32 %v473, %v481
        %v489 = vmul.f32 %v474, %v485
        %490 = vrot.lane.b32.xlu0 %v354, 113
        %v491 = vpop.permute.xlu0 %490
        %492 = vrot.lane.b32.xlu0 %v356, 113
        %v493 = vpop.permute.xlu0 %492
        %vm494 = vcmp.lt.s32.totalorder %v369, 113
        %v495 = vsel %vm494, %v491, %v493
        %v496 = vsel %vm494, %v493, %v491
        %s497 = scalar_lea.vmem %s5, 12
        %v498 = vld [vmem:[%s497] sm:$0x3]
        %v500 = vlaneseq
        %v501 = vshrl.u32 %v500, 7
        %v502 = vsub.s32 0, %v501
        %v503 = vrot.slane %v498, %v502
        %v504 = vlaneseq
        %v505 = vshrl.u32 %v504, 7
        %v506 = vsub.s32 1, %v505
        %v507 = vrot.slane %v498, %v506
        %v510 = vmul.f32 %v495, %v503
        %v511 = vmul.f32 %v496, %v507
        %512 = vrot.lane.b32.xlu0 %v354, 112
        %v513 = vpop.permute.xlu0 %512
        %514 = vrot.lane.b32.xlu0 %v356, 112
        %v515 = vpop.permute.xlu0 %514
        %vm516 = vcmp.lt.s32.totalorder %v369, 112
        %v517 = vsel %vm516, %v513, %v515
        %v518 = vsel %vm516, %v515, %v513
        %s519 = scalar_lea.vmem %s5, 14
        %v520 = vld [vmem:[%s519] sm:$0x3]
        %v522 = vlaneseq
        %v523 = vshrl.u32 %v522, 7
        %v524 = vsub.s32 0, %v523
        %v525 = vrot.slane %v520, %v524
        %v526 = vlaneseq
        %v527 = vshrl.u32 %v526, 7
        %v528 = vsub.s32 1, %v527
        %v529 = vrot.slane %v520, %v528
        %v532 = vmul.f32 %v517, %v525
        %v533 = vmul.f32 %v518, %v529
        %534 = vrot.lane.b32.xlu0 %v354, 111
        %v535 = vpop.permute.xlu0 %534
        %536 = vrot.lane.b32.xlu0 %v356, 111
        %v537 = vpop.permute.xlu0 %536
        %vm538 = vcmp.lt.s32.totalorder %v369, 111
        %v539 = vsel %vm538, %v535, %v537
        %v540 = vsel %vm538, %v537, %v535
        %s541 = scalar_lea.vmem %s5, 16
        %v542 = vld [vmem:[%s541] sm:$0x3]
        %v544 = vlaneseq
        %v545 = vshrl.u32 %v544, 7
        %v546 = vsub.s32 0, %v545
        %v547 = vrot.slane %v542, %v546
        %v548 = vlaneseq
        %v549 = vshrl.u32 %v548, 7
        %v550 = vsub.s32 1, %v549
        %v551 = vrot.slane %v542, %v550
        %v554 = vmul.f32 %v539, %v547
        %v555 = vmul.f32 %v540, %v551
        %v556 = vld [vmem:[%s2] sm:$0xff]
        %v557 = vld [vmem:[%s2 + $0x8] sm:$0xff]
        %v558 = vld [vmem:[%s2 + $0x10] sm:$0xff]
        %v559 = vld [vmem:[%s2 + $0x18] sm:$0xff]
        %v560 = vld [vmem:[%s3] sm:$0xff]
        %v561 = vld [vmem:[%s3 + $0x8] sm:$0xff]
        %v562 = vld [vmem:[%s3 + $0x10] sm:$0xff]
        %v563 = vld [vmem:[%s3 + $0x18] sm:$0xff]
        %565 = vset.pattern.permute.xlu0 0
        %566 = vperm.xlu0 %565, %v560
        %v567 = vpop.permute.xlu0 %566
        %570 = vset.pattern.permute.xlu0 0
        %571 = vperm.xlu0 %570, %v561
        %v572 = vpop.permute.xlu0 %571
        %575 = vset.pattern.permute.xlu0 0
        %576 = vperm.xlu0 %575, %v562
        %v577 = vpop.permute.xlu0 %576
        %580 = vset.pattern.permute.xlu0 0
        %581 = vperm.xlu0 %580, %v563
        %v582 = vpop.permute.xlu0 %581
        %vm584 = vcmask 588800
        %v586 = vsel %vm584, %v556, 0
        %v589 = vsel %vm584, %v557, 0
        %v592 = vsel %vm584, %v558, 0
        %v595 = vsel %vm584, %v559, 0
        %597 = vmatprep.subr.mxu0 %v386
        %598 = vmatpush1.msra.mxu0 %v385
        %599 = vmatprep.subr.mxu0 %v408
        %600 = vmatpush1.msra.mxu0 %v407
        %601 = vmatprep.subr.mxu0 %v430
        %602 = vmatpush1.msra.mxu0 %v429
        %603 = vmatprep.subr.mxu0 %v452
        %604 = vmatpush1.msra.mxu0 %v451
        %605 = vmatprep.subr.mxu0 %v467
        %606 = vmatpush1.msra.mxu0 %v466
        %607 = vmatprep.subr.mxu0 %v489
        %608 = vmatpush1.msra.mxu0 %v488
        %609 = vmatprep.subr.mxu0 %v511
        %610 = vmatpush1.msra.mxu0 %v510
        %611 = vmatprep.subr.mxu0 %v533
        %612 = vmatpush1.msra.mxu0 %v532
        %613 = vmatprep.subr.mxu0 %v555
        %614 = vmatpush1.msra.mxu0 %v554
        %615 = vmatprep.subr.mxu0 0.0
        %616 = vmatpush1.msra.mxu0 0.0
        %617 = vmatprep.subr.mxu0 0.0
        %618 = vmatpush1.msra.mxu0 0.0
        %619 = vmatprep.subr.mxu0 0.0
        %620 = vmatpush1.msra.mxu0 0.0
        %621 = vmatprep.subr.mxu0 0.0
        %622 = vmatpush1.msra.mxu0 0.0
        %623 = vmatprep.subr.mxu0 0.0
        %624 = vmatpush1.msra.mxu0 0.0
        %625 = vmatprep.subr.mxu0 0.0
        %626 = vmatpush1.msra.mxu0 0.0
        %627 = vmatprep.subr.mxu0 0.0
        %628 = vmatpush1.msra.mxu0 0.0
        %629 = vmatprep.subr.mxu0 0.0
        %630 = vmatpush1.msra.mxu0 0.0
        %631 = vmatprep.subr.mxu0 0.0
        %632 = vmatpush1.msra.mxu0 0.0
        %633 = vmatprep.subr.mxu0 0.0
        %634 = vmatpush1.msra.mxu0 0.0
        %635 = vmatprep.subr.mxu0 0.0
        %636 = vmatpush1.msra.mxu0 0.0
        %637 = vmatprep.subr.mxu0 0.0
        %638 = vmatpush1.msra.mxu0 0.0
        %639 = vmatprep.subr.mxu0 0.0
        %640 = vmatpush1.msra.mxu0 0.0
        %641 = vmatprep.subr.mxu0 0.0
        %642 = vmatpush1.msra.mxu0 0.0
        %643 = vmatprep.subr.mxu0 0.0
        %644 = vmatpush1.msra.mxu0 0.0
        %645 = vmatprep.subr.mxu0 0.0
        %646 = vmatpush1.msra.mxu0 0.0
        %647 = vmatprep.subr.mxu0 0.0
        %648 = vmatpush1.msra.mxu0 0.0
        %649 = vmatprep.subr.mxu0 0.0
        %650 = vmatpush1.msra.mxu0 0.0
        %651 = vmatprep.subr.mxu0 0.0
        %652 = vmatpush1.msra.mxu0 0.0
        %653 = vmatprep.subr.mxu0 0.0
        %654 = vmatpush1.msra.mxu0 0.0
        %655 = vmatprep.subr.mxu0 0.0
        %656 = vmatpush1.msra.mxu0 0.0
        %657 = vmatprep.subr.mxu0 0.0
        %658 = vmatpush1.msra.mxu0 0.0
        %659 = vmatprep.subr.mxu0 0.0
        %660 = vmatpush1.msra.mxu0 0.0
        %661 = vmatprep.mubr.f32.mxu0 0.0
        %662 = vmatmul.mubr.f32.gmra.mrb[0].mxu0 %v586
        %v663 = vpop.f32.mrb[0].mxu0
        %v664 = vadd.f32 %v567, %v663
        %v665 = vpop.f32.mrb[0].mxu0
        %v666 = vadd.f32 %v567, %v665
        %667 = vmatprep.mubr.f32.mxu0 0.0
        %668 = vmatmul.mubr.f32.gmra.mrb[0].mxu0 %v589
        %v669 = vpop.f32.mrb[0].mxu0
        %v670 = vadd.f32 %v572, %v669
        %v671 = vpop.f32.mrb[0].mxu0
        %v672 = vadd.f32 %v572, %v671
        %673 = vmatprep.mubr.f32.mxu0 0.0
        %674 = vmatmul.mubr.f32.gmra.mrb[0].mxu0 %v592
        %v675 = vpop.f32.mrb[0].mxu0
        %v676 = vadd.f32 %v577, %v675
        %v677 = vpop.f32.mrb[0].mxu0
        %v678 = vadd.f32 %v577, %v677
        %679 = vmatprep.mubr.f32.mxu0 0.0
        %680 = vmatmul.mubr.f32.gmra.mrb[0].mxu0 %v595
        %v681 = vpop.f32.mrb[0].mxu0
        %v682 = vadd.f32 %v582, %v681
        %v683 = vpop.f32.mrb[0].mxu0
        %v684 = vadd.f32 %v582, %v683
        %685 = vdwg.mxu0
        %v686 = vld [vmem:[%s4] sm:$0xff]
        %v687 = vld [vmem:[%s4 + $0x8] sm:$0xff]
        %v688 = vld [vmem:[%s4 + $0x10] sm:$0xff]
        %v689 = vld [vmem:[%s4 + $0x18] sm:$0xff]
        %vm690 = vcmask 64512
        %v692 = vsel %vm690, %v686, 0
        %v695 = vsel %vm690, %v687, 0
        %v698 = vsel %vm690, %v688, 0
        %v701 = vsel %vm690, %v689, 0
        %703 = vmatprep.subr.mxu0 %v362
        %704 = vmatpush1.msra.mxu0 %v360
        %705 = vmatprep.subr.mxu0 0.0
        %706 = vmatpush1.msra.mxu0 0.0
        %707 = vmatprep.subr.mxu0 0.0
        %708 = vmatpush1.msra.mxu0 0.0
        %709 = vmatprep.subr.mxu0 0.0
        %710 = vmatpush1.msra.mxu0 0.0
        %711 = vmatprep.subr.mxu0 0.0
        %712 = vmatpush1.msra.mxu0 0.0
        %713 = vmatprep.subr.mxu0 0.0
        %714 = vmatpush1.msra.mxu0 0.0
        %715 = vmatprep.subr.mxu0 0.0
        %716 = vmatpush1.msra.mxu0 0.0
        %717 = vmatprep.subr.mxu0 0.0
        %718 = vmatpush1.msra.mxu0 0.0
        %719 = vmatprep.subr.mxu0 0.0
        %720 = vmatpush1.msra.mxu0 0.0
        %721 = vmatprep.subr.mxu0 0.0
        %722 = vmatpush1.msra.mxu0 0.0
        %723 = vmatprep.subr.mxu0 0.0
        %724 = vmatpush1.msra.mxu0 0.0
        %725 = vmatprep.subr.mxu0 0.0
        %726 = vmatpush1.msra.mxu0 0.0
        %727 = vmatprep.subr.mxu0 0.0
        %728 = vmatpush1.msra.mxu0 0.0
        %729 = vmatprep.subr.mxu0 0.0
        %730 = vmatpush1.msra.mxu0 0.0
        %731 = vmatprep.subr.mxu0 0.0
        %732 = vmatpush1.msra.mxu0 0.0
        %733 = vmatprep.subr.mxu0 0.0
        %734 = vmatpush1.msra.mxu0 0.0
        %735 = vmatprep.subr.mxu0 0.0
        %736 = vmatpush1.msra.mxu0 0.0
        %737 = vmatprep.subr.mxu0 0.0
        %738 = vmatpush1.msra.mxu0 0.0
        %739 = vmatprep.subr.mxu0 0.0
        %740 = vmatpush1.msra.mxu0 0.0
        %741 = vmatprep.subr.mxu0 0.0
        %742 = vmatpush1.msra.mxu0 0.0
        %743 = vmatprep.subr.mxu0 0.0
        %744 = vmatpush1.msra.mxu0 0.0
        %745 = vmatprep.subr.mxu0 0.0
        %746 = vmatpush1.msra.mxu0 0.0
        %747 = vmatprep.subr.mxu0 0.0
        %748 = vmatpush1.msra.mxu0 0.0
        %749 = vmatprep.subr.mxu0 0.0
        %750 = vmatpush1.msra.mxu0 0.0
        %751 = vmatprep.subr.mxu0 0.0
        %752 = vmatpush1.msra.mxu0 0.0
        %753 = vmatprep.subr.mxu0 0.0
        %754 = vmatpush1.msra.mxu0 0.0
        %755 = vmatprep.subr.mxu0 0.0
        %756 = vmatpush1.msra.mxu0 0.0
        %757 = vmatprep.subr.mxu0 0.0
        %758 = vmatpush1.msra.mxu0 0.0
        %759 = vmatprep.subr.mxu0 0.0
        %760 = vmatpush1.msra.mxu0 0.0
        %761 = vmatprep.subr.mxu0 0.0
        %762 = vmatpush1.msra.mxu0 0.0
        %763 = vmatprep.subr.mxu0 0.0
        %764 = vmatpush1.msra.mxu0 0.0
        %765 = vmatprep.subr.mxu0 0.0
        %766 = vmatpush1.msra.mxu0 0.0
        %767 = vmatprep.mubr.f32.mxu0 0.0
        %768 = vmatmul.mubr.f32.gmra.mrb[0].mxu0 %v692
        %v769 = vpop.f32.mrb[0].mxu0
        %v770 = vadd.f32 0.0, %v769
        %v771 = vpop.f32.mrb[0].mxu0
        %v772 = vadd.f32 0.0, %v771
        %773 = vmatprep.mubr.f32.mxu0 0.0
        %774 = vmatmul.mubr.f32.gmra.mrb[0].mxu0 %v695
        %v775 = vpop.f32.mrb[0].mxu0
        %v776 = vadd.f32 0.0, %v775
        %v777 = vpop.f32.mrb[0].mxu0
        %v778 = vadd.f32 0.0, %v777
        %779 = vmatprep.mubr.f32.mxu0 0.0
        %780 = vmatmul.mubr.f32.gmra.mrb[0].mxu0 %v698
        %v781 = vpop.f32.mrb[0].mxu0
        %v782 = vadd.f32 0.0, %v781
        %v783 = vpop.f32.mrb[0].mxu0
        %v784 = vadd.f32 0.0, %v783
        %785 = vmatprep.mubr.f32.mxu0 0.0
        %786 = vmatmul.mubr.f32.gmra.mrb[0].mxu0 %v701
        %v787 = vpop.f32.mrb[0].mxu0
        %v788 = vadd.f32 0.0, %v787
        %v789 = vpop.f32.mrb[0].mxu0
        %v790 = vadd.f32 0.0, %v789
        %791 = vdwg.mxu0
        %v792 = vadd.f32 %v664, %v666
        %793 = vadd.xlane.f32.xlu0 %v792
        %v794 = vpop.xlane.xlu0 %793
        %v795 = vadd.f32 %v670, %v672
        %796 = vadd.xlane.f32.xlu0 %v795
        %v797 = vpop.xlane.xlu0 %796
        %v798 = vadd.f32 %v676, %v678
        %799 = vadd.xlane.f32.xlu0 %v798
        %v800 = vpop.xlane.xlu0 %799
        %v801 = vadd.f32 %v682, %v684
        %802 = vadd.xlane.f32.xlu0 %v801
        %v803 = vpop.xlane.xlu0 %802
        %v804 = vmul.f32 %v794, 0.00390625
        %v805 = vmul.f32 %v797, 0.00390625
        %v806 = vmul.f32 %v800, 0.00390625
        %v807 = vmul.f32 %v803, 0.00390625
        %v808 = vadd.f32 %v770, %v772
        %809 = vadd.xlane.f32.xlu0 %v808
        %v810 = vpop.xlane.xlu0 %809
        %v811 = vadd.f32 %v776, %v778
        %812 = vadd.xlane.f32.xlu0 %v811
        %v813 = vpop.xlane.xlu0 %812
        %v814 = vadd.f32 %v782, %v784
        %815 = vadd.xlane.f32.xlu0 %v814
        %v816 = vpop.xlane.xlu0 %815
        %v817 = vadd.f32 %v788, %v790
        %818 = vadd.xlane.f32.xlu0 %v817
        %v819 = vpop.xlane.xlu0 %818
        %v820 = vmul.f32 %v810, 0.00390625
        %v821 = vmul.f32 %v813, 0.00390625
        %v822 = vmul.f32 %v816, 0.00390625
        %v823 = vmul.f32 %v819, 0.00390625
        %vm824 = vcmask 7168
        %v825 = vsel %vm824, %v804, -inf
        %v826 = vsel %vm824, %v805, -inf
        %v827 = vsel %vm824, %v806, -inf
        %v828 = vsel %vm824, %v807, -inf
        %v829 = vsel %vm824, %v820, -inf
        %v830 = vmax.f32 %v825, %v829
        %v831 = vsel %vm824, %v821, -inf
        %v832 = vmax.f32 %v826, %v831
        %v833 = vsel %vm824, %v822, -inf
        %v834 = vmax.f32 %v827, %v833
        %v835 = vsel %vm824, %v823, -inf
        %v836 = vmax.f32 %v828, %v835
        %v837 = vmax.f32 %v830, %v832
        %v838 = vmax.f32 %v834, %v836
        %v839 = vmax.f32 %v837, %v838
        %v840 = vrot.slane %v839, 4
        %v841 = vmax.f32 %v839, %v840
        %v842 = vrot.slane %v841, 2
        %v843 = vmax.f32 %v841, %v842
        %v844 = vrot.slane %v843, 1
        %v845 = vmax.f32 %v843, %v844
        %v846 = vsub.f32 %v804, %v845
        %v847 = vsub.f32 %v805, %v845
        %v848 = vsub.f32 %v806, %v845
        %v849 = vsub.f32 %v807, %v845
        %v850 = vsub.f32 %v820, %v845
        %v851 = vsub.f32 %v821, %v845
        %v852 = vsub.f32 %v822, %v845
        %v853 = vsub.f32 %v823, %v845
        %v854 = vmul.f32 %v846, 1.442695
        %v855 = vpow.pop %v854
        %v856 = vmul.f32 %v847, 1.442695
        %v857 = vpow.pop %v856
        %v858 = vmul.f32 %v848, 1.442695
        %v859 = vpow.pop %v858
        %v860 = vmul.f32 %v849, 1.442695
        %v861 = vpow.pop %v860
        %v862 = vmul.f32 %v850, 1.442695
        %v863 = vpow.pop %v862
        %v864 = vmul.f32 %v851, 1.442695
        %v865 = vpow.pop %v864
        %v866 = vmul.f32 %v852, 1.442695
        %v867 = vpow.pop %v866
        %v868 = vmul.f32 %v853, 1.442695
        %v869 = vpow.pop %v868
        %v870 = vsel %vm824, %v855, 0.0
        %v871 = vsel %vm824, %v857, 0.0
        %v872 = vadd.f32 %v870, %v871
        %v873 = vsel %vm824, %v859, 0.0
        %v874 = vadd.f32 %v872, %v873
        %v875 = vsel %vm824, %v861, 0.0
        %v876 = vadd.f32 %v874, %v875
        %v877 = vsel %vm824, %v863, 0.0
        %v878 = vadd.f32 %v876, %v877
        %v879 = vsel %vm824, %v865, 0.0
        %v880 = vadd.f32 %v878, %v879
        %v881 = vsel %vm824, %v867, 0.0
        %v882 = vadd.f32 %v880, %v881
        %v883 = vsel %vm824, %v869, 0.0
        %v884 = vadd.f32 %v882, %v883
        %v885 = vrot.slane %v884, 4
        %v886 = vadd.f32 %v884, %v885
        %v887 = vrot.slane %v886, 2
        %v888 = vadd.f32 %v886, %v887
        %v889 = vrot.slane %v888, 1
        %v890 = vadd.f32 %v888, %v889
        %v891 = vrcp.pop %v890
        %v892 = vmul.f32 %v855, %v891
        %v893 = vmul.f32 %v857, %v891
        %v894 = vmul.f32 %v859, %v891
        %v895 = vmul.f32 %v861, %v891
        %v896 = vmul.f32 %v863, %v891
        %v897 = vmul.f32 %v865, %v891
        %v898 = vmul.f32 %v867, %v891
        %v899 = vmul.f32 %v869, %v891
        %901 = vset.pattern.permute.xlu0 0
        %902 = vperm.xlu0 %901, %v892
        %v903 = vpop.permute.xlu0 %902
        %906 = vset.pattern.permute.xlu0 0
        %907 = vperm.xlu0 %906, %v893
        %v908 = vpop.permute.xlu0 %907
        %911 = vset.pattern.permute.xlu0 0
        %912 = vperm.xlu0 %911, %v894
        %v913 = vpop.permute.xlu0 %912
        %916 = vset.pattern.permute.xlu0 0
        %917 = vperm.xlu0 %916, %v895
        %v918 = vpop.permute.xlu0 %917
        %v920 = vmul.f32 %v664, %v903
        %v921 = vmul.f32 %v666, %v903
        %v922 = vmul.f32 %v670, %v908
        %v923 = vmul.f32 %v672, %v908
        %v924 = vmul.f32 %v676, %v913
        %v925 = vmul.f32 %v678, %v913
        %v926 = vmul.f32 %v682, %v918
        %v927 = vmul.f32 %v684, %v918
        %929 = vset.pattern.permute.xlu0 0
        %930 = vperm.xlu0 %929, %v896
        %v931 = vpop.permute.xlu0 %930
        %934 = vset.pattern.permute.xlu0 0
        %935 = vperm.xlu0 %934, %v897
        %v936 = vpop.permute.xlu0 %935
        %939 = vset.pattern.permute.xlu0 0
        %940 = vperm.xlu0 %939, %v898
        %v941 = vpop.permute.xlu0 %940
        %944 = vset.pattern.permute.xlu0 0
        %945 = vperm.xlu0 %944, %v899
        %v946 = vpop.permute.xlu0 %945
        %v948 = vmul.f32 %v770, %v931
        %v949 = vmul.f32 %v772, %v931
        %v950 = vmul.f32 %v776, %v936
        %v951 = vmul.f32 %v778, %v936
        %v952 = vmul.f32 %v782, %v941
        %v953 = vmul.f32 %v784, %v941
        %v954 = vmul.f32 %v788, %v946
        %v955 = vmul.f32 %v790, %v946
        %v956 = vadd.f32 %v920, %v948
        %v957 = vadd.f32 %v921, %v949
        %v958 = vadd.f32 %v922, %v950
        %v959 = vadd.f32 %v923, %v951
        %v960 = vadd.f32 %v924, %v952
        %v961 = vadd.f32 %v925, %v953
        %v962 = vadd.f32 %v926, %v954
        %v963 = vadd.f32 %v927, %v955
        %964 = vst [vmem:[%s269] sm:$0xff] %v956
        %965 = vst [vmem:[%s269 + $0x8] sm:$0xff] %v957
        %966 = vst [vmem:[%s269 + $0x10] sm:$0xff] %v958
        %967 = vst [vmem:[%s269 + $0x18] sm:$0xff] %v959
        %968 = vst [vmem:[%s269 + $0x20] sm:$0xff] %v960
        %969 = vst [vmem:[%s269 + $0x28] sm:$0xff] %v961
        %970 = vst [vmem:[%s269 + $0x30] sm:$0xff] %v962
        %971 = vst [vmem:[%s269 + $0x38] sm:$0xff] %v963
        %s972 = sand.u32 %s162, 1
        %s973 = scalar_lea.sflag [#allocation4], %s972
        %s974 = sand.u32 %s162, 1
        %s975 = smul.addr %s974, 64
        %s976 = scalar_lea.vmem [#allocation5], %s975
        // Predicated region
        $region49: #{tpu_custom_call.1} parent=43 // pred_check
          %p977 = pneg %p172
        $region50: #{tpu_custom_call.1} parent=43 // pred_check_branch
          %979 = sbr.rel (%p977) target = $region52
        $region51: #{tpu_custom_call.1} parent=43 // pred_region
          %s981 = ssub.s32 1024, 1024
          %982 = vsyncadd %s973, %s981
          %s983 = smul.addr %s23, 8
          %s984 = smul.addr %s983, 128
          %s985 = scalar_lea.hbm %s6, %s984
          %s986 = sshll.u32 %s976, 4
          %s987 = int_to_ptr.vmem [resolvable:$true] %s986
          %992 = dma.vmem_to_hbm [thread:$0]  %s987, 1024, %s985, %s973, 256, 256, 16
        $region52: #{tpu_custom_call.1} parent=43 // pred_fallthru
          _
      $region44: #{tpu_custom_call.1} parent=5 // pred_fallthru
        _
      %p993 = scmp.le.s32.totalorder 2, %s18
      // Predicated region
      $region53: #{tpu_custom_call.1} parent=5 // pred_check
        %p994 = pneg %p993
      $region54: #{tpu_custom_call.1} parent=5 // pred_check_branch
        %996 = sbr.rel (%p994) target = $region56
      $region55: #{tpu_custom_call.1} parent=5 // pred_region
        %s997 = ssub.s32 %s18, 2
        // Predicated region
        $region57: #{tpu_custom_call.1} parent=55 // pred_check
          %p998 = pneg %p178
        $region58: #{tpu_custom_call.1} parent=55 // pred_check_branch
          %1000 = sbr.rel (%p998) target = $region60
        $region59: #{tpu_custom_call.1} parent=55 // pred_region
          %s1001 = sand.u32 %s163, 1
          %s1002 = scalar_lea.sflag [#allocation4], %s1001
          %s1003 = sand.u32 %s163, 1
          %s1004 = smul.addr %s1003, 64
          %s1005 = scalar_lea.vmem [#allocation5], %s1004
          %1006 = dma.done %s1002, 1024
        $region60: #{tpu_custom_call.1} parent=55 // pred_fallthru
          _
      $region56: #{tpu_custom_call.1} parent=5 // pred_fallthru
        _
    $region6: #{tpu_custom_call.1} parent=1 // loop_footer
      %s22 = sadd.s32 1, %s18
    $region7: #{tpu_custom_call.1} parent=1 // loop_footer_branch
      %17 = sbr.rel target = $region3
    $region8: #{tpu_custom_call.1} parent=1 // loop_exit
      _
    %1007 = vsyncpa [#allocation3], 1
    %s1008 = scalar_lea.sflag [#allocation3], 1
    %1009 = vsyncpa %s1008, 1
    %1010 = vsyncpa [#allocation4], 1
    %s1011 = scalar_lea.sflag [#allocation4], 1
    %1012 = vsyncpa %s1011, 1

</llo_original>
